<compile_context>
chip_gen: v5e
topology: v5e:2x2
jax: 0.10.0
libtpu: 0.0.40
codegen_flags: <defaults>
</compile_context>

<pallas_src>
import functools

import jax
import jax.numpy as jnp
from jax.experimental import pallas as pl
from jax.experimental.pallas import tpu as pltpu


def _cross_attn_kernel(x_ref, c_ref, mask_ref,
                       wq_ref, wkv_ref, wp_ref, bp_ref,
                       o_ref, y_ref, *,
                       num_heads: int, head_dim: int,
                       block_b: int, seq_n: int, seq_l: int):
    """One grid step: `block_b` batch elements, all heads, all positions.

    x_ref:    (block_b * seq_n, C)  flattened main-sequence tokens (pipelined)
    c_ref:    (block_b * seq_l, C)  flattened condition tokens (pipelined)
    mask_ref: (B, L) int32, whole array VMEM-resident, 1 = valid key
    w*_ref:   whole weights VMEM-resident (single copy, not double-buffered)
    y_ref:    (block_b * seq_n, C)  scratch in the compute dtype
    """
    cdt = x_ref.dtype                       # MXU operand dtype (bf16 in prod)
    C = num_heads * head_dim
    scale = jnp.float32(head_dim) ** jnp.float32(-0.5)

    # ---- fused projections over the whole batch block (one matmul each) ----
    xf = x_ref[...]                          # (block_b*N, C)
    cf = c_ref[...]                          # (block_b*L, C)
    q = (jnp.dot(xf, wq_ref[...], preferred_element_type=jnp.float32)
         * scale).astype(cdt)                # scale applied once, not per head
    kv = jnp.dot(cf, wkv_ref[...],
                 preferred_element_type=jnp.float32).astype(cdt)
    k = kv[:, :C]                            # first C cols = K (matches nn.Linear(dim, 2*dim))
    v = kv[:, C:]                            # last  C cols = V

    g0 = pl.program_id(0) * block_b          # first global batch index of this block

    # ---- per-(batch, head) attention core: O(block_b) MXU work -------------
    for b in range(block_b):                 # static; block_b is small
        # Per-batch key-padding bias (1, L). Finite value keeps exp() clean.
        mrow = mask_ref[pl.ds(g0 + b, 1), :]                     # (1, L) int32
        bias = jnp.where(mrow > 0, jnp.float32(0.0), jnp.float32(-1e30))
        # Fully-masked batch -> gate attention output to zero (reference: NaN).
        any_valid = (jnp.sum(mrow) > 0).astype(jnp.float32)

        qb = q[b * seq_n:(b + 1) * seq_n, :]                     # (N, C)
        kb = k[b * seq_l:(b + 1) * seq_l, :]                     # (L, C)
        vb = v[b * seq_l:(b + 1) * seq_l, :]                     # (L, C)

        for h in range(num_heads):           # TODO(synk): fori_loop for many heads
            s0 = h * head_dim
            qh = qb[:, s0:s0 + head_dim]                         # (N, hd)
            kh = kb[:, s0:s0 + head_dim]                         # (L, hd)
            vh = vb[:, s0:s0 + head_dim]                         # (L, hd)

            sc = jnp.einsum('nd,ld->nl', qh, kh,
                            preferred_element_type=jnp.float32) + bias
            m = jnp.max(sc, axis=-1, keepdims=True)
            e = jnp.exp(sc - m)
            denom = jnp.sum(e, axis=-1, keepdims=True)
            attn = (e * pl.reciprocal(denom, approx=True)).astype(cdt)

            yh = jnp.dot(attn, vh, preferred_element_type=jnp.float32) * any_valid
            # scatter this head's slab into the scratch accumulator (no concat)
            y_ref[b * seq_n:(b + 1) * seq_n, s0:s0 + head_dim] = yh.astype(cdt)

    # ---- fused output projection over the whole batch block ----------------
    out = jnp.dot(y_ref[...], wp_ref[...],
                  preferred_element_type=jnp.float32) + bp_ref[...]
    o_ref[...] = out.astype(o_ref.dtype)


def cross_attention(x, c, mask, wq, wkv, wp, bp, *,
                    num_heads: int, block_b: int | None = None):
    """x: (B, N, C), c: (B, L, C), mask: (B, L) (1 = keep, 0 = mask).

    wq: (C, C), wkv: (C, 2C) (K cols first, then V), wp: (C, C), bp: (C,).
    """
    B, N, C = x.shape
    _, L, _ = c.shape
    assert C % num_heads == 0
    head_dim = C // num_heads
    assert wq.shape == (C, C) and wkv.shape == (C, 2 * C) and wp.shape == (C, C)

    dt = x.dtype
    # Sublane alignment required for batch tiles smaller than the full batch.
    sub = {4: 8, 2: 16, 1: 32}.get(jnp.dtype(dt).itemsize, 8)

    if block_b is None:
        # Prefer >= 2 grid steps (DMA/compute pipelining; both v7x TensorCores)
        # whenever the sublane constraint allows it; otherwise whole batch.
        block_b = B
        if B % 2 == 0 and ((B // 2) * N) % sub == 0 and ((B // 2) * L) % sub == 0:
            block_b = B // 2
    assert B % block_b == 0
    if block_b != B:
        assert (block_b * N) % sub == 0 and (block_b * L) % sub == 0, (
            "batch tile must keep sublane dims aligned; pass block_b=B")

    # Flatten (batch, seq) outside the kernel (contiguous -> free in XLA) so
    # the kernel only sees lane-friendly 2-D tiles.
    x2 = x.reshape(B * N, C)
    c2 = c.reshape(B * L, C).astype(dt)
    mask2 = mask.astype(jnp.int32)                      # (B, L), VMEM-resident
    wq2, wkv2, wp2 = (w.astype(dt) for w in (wq, wkv, wp))
    bp2 = bp.reshape(1, C).astype(jnp.float32)

    bm, bl = block_b * N, block_b * L
    # Whole-array, single-copy VMEM residency (no grid double-buffering).
    vmem_resident = pl.BlockSpec(memory_space=pltpu.MemorySpace.VMEM)

    kernel = functools.partial(
        _cross_attn_kernel, num_heads=num_heads, head_dim=head_dim,
        block_b=block_b, seq_n=N, seq_l=L)

    out2 = pl.pallas_call(
        kernel,
        out_shape=jax.ShapeDtypeStruct((B * N, C), dt),
        grid_spec=pltpu.PrefetchScalarGridSpec(
            num_scalar_prefetch=0,
            grid=(B // block_b,),
            in_specs=[
                pl.BlockSpec((bm, C), lambda i: (i, 0)),   # x   (pipelined)
                pl.BlockSpec((bl, C), lambda i: (i, 0)),   # c   (pipelined)
                vmem_resident,                              # mask (1 copy)
                vmem_resident,                              # wq   (1 copy)
                vmem_resident,                              # wkv  (1 copy)
                vmem_resident,                              # wp   (1 copy)
                vmem_resident,                              # bp   (1 copy)
            ],
            out_specs=pl.BlockSpec((bm, C), lambda i: (i, 0)),
            scratch_shapes=[pltpu.VMEM((bm, C), dt)],      # compute-dtype scratch
        ),
        compiler_params=pltpu.CompilerParams(
            dimension_semantics=("parallel",),
            vmem_limit_bytes=48 * 1024 * 1024),
    )(x2, c2, mask2, wq2, wkv2, wp2, bp2)
    return out2.reshape(B, N, C)


def cross_attention_ref(x, c, mask, wq, wkv, wp, bp, *, num_heads: int):
    """Pure-JAX reference mirroring the PyTorch forward (no dropout, no qk_norm)."""
    B, N, C = x.shape
    _, L, _ = c.shape
    hd = C // num_heads
    q = (x @ wq).reshape(B, N, num_heads, hd).transpose(0, 2, 1, 3)
    kv = (c @ wkv).reshape(B, L, 2, num_heads, hd).transpose(2, 0, 3, 1, 4)
    k, v = kv[0], kv[1]
    scores = (q * hd ** -0.5) @ jnp.swapaxes(k, -2, -1)          # (B, H, N, L)
    m = (mask > 0)[:, None, None, :]
    scores = jnp.where(m, scores, -jnp.inf)
    attn = jax.nn.softmax(scores, axis=-1)
    y = (attn @ v).transpose(0, 2, 1, 3).reshape(B, N, C)
    return y @ wp + bp


if __name__ == "__main__":
    # Small shapes consistent with the module: B=2, N=8 (action seq),
    # L=16 (condition seq), C=32 hidden, 4 heads -> head_dim=8.
    B, N, L, C, H = 2, 8, 16, 32, 4

    key = jax.random.PRNGKey(0)
    kx, kc, kq, kkv, kp, kb, km = jax.random.split(key, 7)

    x = jax.random.normal(kx, (B, N, C), dtype=jnp.float32)
    c = jax.random.normal(kc, (B, L, C), dtype=jnp.float32)

    # Deterministic parameter init (qkv_bias=False, proj has bias).
    wq = jax.random.normal(kq, (C, C), dtype=jnp.float32) * (C ** -0.5)
    wkv = jax.random.normal(kkv, (C, 2 * C), dtype=jnp.float32) * (C ** -0.5)
    wp = jax.random.normal(kp, (C, C), dtype=jnp.float32) * (C ** -0.5)
    bp = jax.random.normal(kb, (C,), dtype=jnp.float32) * 0.01

    # Mask (B, L): 1 = valid, 0 = ignored; keep at least the first half valid.
    mask = jnp.concatenate(
        [jnp.ones((B, L // 2), jnp.int32),
         jax.random.bernoulli(km, 0.5, (B, L // 2)).astype(jnp.int32)],
        axis=1)

    ref = cross_attention_ref(x, c, mask, wq, wkv, wp, bp, num_heads=H)

    # f32 path (grid of 2 steps; batch-tiled blocks).
    out = cross_attention(x, c, mask, wq, wkv, wp, bp, num_heads=H)
    out = jax.block_until_ready(out)
    assert out.shape == (B, N, C)
    # Tolerance covers the approximate EUP reciprocal in the softmax denom.
    assert jnp.allclose(out, ref, atol=5e-3, rtol=5e-3), (
        f"f32 max abs err {jnp.max(jnp.abs(out - ref))}")

    # Production bf16 MXU path (falls back to a full-batch block at these tiny
    # shapes because bf16 needs 16-row sublane alignment for sub-batch tiles).
    out_bf16 = cross_attention(x.astype(jnp.bfloat16), c.astype(jnp.bfloat16),
                               mask, wq, wkv, wp, bp, num_heads=H)
    out_bf16 = jax.block_until_ready(out_bf16)
    assert out_bf16.dtype == jnp.bfloat16
    err = jnp.max(jnp.abs(out_bf16.astype(jnp.float32) - ref))
    assert jnp.allclose(out_bf16.astype(jnp.float32), ref, atol=0.15, rtol=0.1), (
        f"bf16 max abs err {err}")

    print("KERNEL_OK")
</pallas_src>

<mosaic_0001>
module attributes {stable_mosaic.version = 11 : i64} {
  func.func @_cross_attn_kernel(%arg0: i32, %arg1: memref<8x32xf32, #tpu.memory_space<vmem>>, %arg2: memref<16x32xf32, #tpu.memory_space<vmem>>, %arg3: memref<2x16xi32, #tpu.memory_space<vmem>>, %arg4: memref<32x32xf32, #tpu.memory_space<vmem>>, %arg5: memref<32x64xf32, #tpu.memory_space<vmem>>, %arg6: memref<32x32xf32, #tpu.memory_space<vmem>>, %arg7: memref<1x32xf32, #tpu.memory_space<vmem>>, %arg8: memref<8x32xf32, #tpu.memory_space<vmem>>, %arg9: memref<8x32xf32, #tpu.memory_space<vmem>>) attributes {dimension_semantics = [#tpu.dimension_semantics<parallel>], iteration_bounds = array<i64: 2>, scalar_prefetch = 0 : i64, scratch_operands = 1 : i64, tpu.core_type = #tpu.core_type<tc>, window_params = [{transform_indices = @transform_0, window_bounds = array<i64: 8, 32>}, {transform_indices = @transform_1, window_bounds = array<i64: 16, 32>}, {pipeline_mode = #tpu.pipeline_mode<synchronous>, transform_indices = @transform_2, window_bounds = array<i64: 2, 16>}, {pipeline_mode = #tpu.pipeline_mode<synchronous>, transform_indices = @transform_3, window_bounds = array<i64: 32, 32>}, {pipeline_mode = #tpu.pipeline_mode<synchronous>, transform_indices = @transform_4, window_bounds = array<i64: 32, 64>}, {pipeline_mode = #tpu.pipeline_mode<synchronous>, transform_indices = @transform_5, window_bounds = array<i64: 32, 32>}, {pipeline_mode = #tpu.pipeline_mode<synchronous>, transform_indices = @transform_6, window_bounds = array<i64: 1, 32>}, {transform_indices = @transform_7, window_bounds = array<i64: 8, 32>}]} {
    %cst = arith.constant 8.000000e+00 : f32
    %cst_0 = arith.constant -5.000000e-01 : f32
    %0 = math.powf %cst, %cst_0 : f32
    %c0 = arith.constant 0 : index
    %c0_1 = arith.constant 0 : index
    %1 = vector.load %arg1[%c0, %c0_1] : memref<8x32xf32, #tpu.memory_space<vmem>>, vector<8x32xf32>
    %c0_2 = arith.constant 0 : index
    %c0_3 = arith.constant 0 : index
    %2 = vector.load %arg2[%c0_2, %c0_3] : memref<16x32xf32, #tpu.memory_space<vmem>>, vector<16x32xf32>
    %c0_4 = arith.constant 0 : index
    %c0_5 = arith.constant 0 : index
    %3 = vector.load %arg4[%c0_4, %c0_5] : memref<32x32xf32, #tpu.memory_space<vmem>>, vector<32x32xf32>
    %cst_6 = arith.constant dense<0.000000e+00> : vector<8x32xf32>
    %4 = tpu.matmul %1, %3, %cst_6 {dimension_numbers = #tpu.dot_dimension_numbers<[1], [0], [0], [1], [0, 0, 1, 1], [], []>} : vector<8x32xf32>, vector<32x32xf32>, vector<8x32xf32> -> vector<8x32xf32>
    %5 = vector.broadcast %0 : f32 to vector<8x32xf32>
    %6 = arith.mulf %4, %5 : vector<8x32xf32>
    %c0_7 = arith.constant 0 : index
    %c0_8 = arith.constant 0 : index
    %7 = vector.load %arg5[%c0_7, %c0_8] : memref<32x64xf32, #tpu.memory_space<vmem>>, vector<32x64xf32>
    %cst_9 = arith.constant dense<0.000000e+00> : vector<16x64xf32>
    %8 = tpu.matmul %2, %7, %cst_9 {dimension_numbers = #tpu.dot_dimension_numbers<[1], [0], [0], [1], [0, 0, 1, 1], [], []>} : vector<16x32xf32>, vector<32x64xf32>, vector<16x64xf32> -> vector<16x64xf32>
    %9 = vector.extract_strided_slice %8 {offsets = [0, 0], sizes = [16, 32], strides = [1, 1]} : vector<16x64xf32> to vector<16x32xf32>
    %10 = vector.extract_strided_slice %8 {offsets = [0, 32], sizes = [16, 32], strides = [1, 1]} : vector<16x64xf32> to vector<16x32xf32>
    %c1_i32 = arith.constant 1 : i32
    %11 = arith.muli %arg0, %c1_i32 : i32
    %c0_i32 = arith.constant 0 : i32
    %12 = arith.addi %11, %c0_i32 : i32
    %13 = arith.index_cast %12 : i32 to index
    %c0_10 = arith.constant 0 : index
    %14 = vector.load %arg3[%13, %c0_10] : memref<2x16xi32, #tpu.memory_space<vmem>>, vector<1x16xi32>
    %c0_i32_11 = arith.constant 0 : i32
    %15 = vector.broadcast %c0_i32_11 : i32 to vector<1x16xi32>
    %16 = arith.cmpi sgt, %14, %15 : vector<1x16xi32>
    %cst_12 = arith.constant 0.000000e+00 : f32
    %cst_13 = arith.constant -1.000000e+30 : f32
    %17 = vector.broadcast %cst_12 : f32 to vector<1x16xf32>
    %18 = vector.broadcast %cst_13 : f32 to vector<1x16xf32>
    %19 = arith.select %16, %17, %18 : vector<1x16xi1>, vector<1x16xf32>
    %20 = vector.shape_cast %14 : vector<1x16xi32> to vector<1x1x16xi32>
    %cst_14 = arith.constant dense<0> : vector<1xi32>
    %21 = vector.multi_reduction <add>, %20, %cst_14 [1, 2] : vector<1x1x16xi32> to vector<1xi32>
    %22 = vector.shape_cast %21 : vector<1xi32> to vector<1x1x1xi32>
    %23 = vector.extract %22[0, 0, 0] : i32 from vector<1x1x1xi32>
    %c0_i32_15 = arith.constant 0 : i32
    %24 = arith.cmpi sgt, %23, %c0_i32_15 : i32
    %25 = arith.extui %24 : i1 to i32
    %26 = arith.sitofp %25 : i32 to f32
    %27 = vector.extract_strided_slice %6 {offsets = [0, 0], sizes = [8, 8], strides = [1, 1]} : vector<8x32xf32> to vector<8x8xf32>
    %28 = vector.extract_strided_slice %9 {offsets = [0, 0], sizes = [16, 8], strides = [1, 1]} : vector<16x32xf32> to vector<16x8xf32>
    %29 = vector.extract_strided_slice %10 {offsets = [0, 0], sizes = [16, 8], strides = [1, 1]} : vector<16x32xf32> to vector<16x8xf32>
    "tpu.trace_start"() <{level = 10 : i32, message = "nd,ld->nl"}> : () -> ()
    %cst_16 = arith.constant dense<0.000000e+00> : vector<8x16xf32>
    %30 = tpu.matmul %27, %28, %cst_16 {dimension_numbers = #tpu.dot_dimension_numbers<[1], [1], [0], [0], [0, 0, 1, 0], [], []>} : vector<8x8xf32>, vector<16x8xf32>, vector<8x16xf32> -> vector<8x16xf32>
    "tpu.trace_stop"() : () -> ()
    %31 = vector.broadcast %19 : vector<1x16xf32> to vector<8x16xf32>
    %32 = arith.addf %30, %31 : vector<8x16xf32>
    %cst_17 = arith.constant dense<0xFF800000> : vector<8xf32>
    %33 = vector.multi_reduction <maximumf>, %32, %cst_17 [1] : vector<8x16xf32> to vector<8xf32>
    %34 = vector.shape_cast %33 : vector<8xf32> to vector<8x1xf32>
    %35 = vector.broadcast %34 : vector<8x1xf32> to vector<8x16xf32>
    %36 = arith.subf %32, %35 : vector<8x16xf32>
    %37 = math.exp %36 : vector<8x16xf32>
    %cst_18 = arith.constant dense<0.000000e+00> : vector<8xf32>
    %38 = vector.multi_reduction <add>, %37, %cst_18 [1] : vector<8x16xf32> to vector<8xf32>
    %39 = vector.shape_cast %38 : vector<8xf32> to vector<8x1xf32>
    %40 = tpu.reciprocal %39 {approx = true} : vector<8x1xf32> -> vector<8x1xf32>
    %41 = vector.broadcast %40 : vector<8x1xf32> to vector<8x16xf32>
    %42 = arith.mulf %37, %41 : vector<8x16xf32>
    %cst_19 = arith.constant dense<0.000000e+00> : vector<8x8xf32>
    %43 = tpu.matmul %42, %29, %cst_19 {dimension_numbers = #tpu.dot_dimension_numbers<[1], [0], [0], [1], [0, 0, 1, 1], [], []>} : vector<8x16xf32>, vector<16x8xf32>, vector<8x8xf32> -> vector<8x8xf32>
    %44 = vector.broadcast %26 : f32 to vector<8x8xf32>
    %45 = arith.mulf %43, %44 : vector<8x8xf32>
    %c0_20 = arith.constant 0 : index
    %c0_21 = arith.constant 0 : index
    %46 = vector.load %arg9[%c0_20, %c0_21] : memref<8x32xf32, #tpu.memory_space<vmem>>, vector<8x8xf32>
    tpu.vector_store %arg9[%c0_20, %c0_21], %45 {strides = array<i32>} : memref<8x32xf32, #tpu.memory_space<vmem>>, vector<8x8xf32>,
    %47 = vector.extract_strided_slice %6 {offsets = [0, 8], sizes = [8, 8], strides = [1, 1]} : vector<8x32xf32> to vector<8x8xf32>
    %48 = vector.extract_strided_slice %9 {offsets = [0, 8], sizes = [16, 8], strides = [1, 1]} : vector<16x32xf32> to vector<16x8xf32>
    %49 = vector.extract_strided_slice %10 {offsets = [0, 8], sizes = [16, 8], strides = [1, 1]} : vector<16x32xf32> to vector<16x8xf32>
    "tpu.trace_start"() <{level = 10 : i32, message = "nd,ld->nl"}> : () -> ()
    %cst_22 = arith.constant dense<0.000000e+00> : vector<8x16xf32>
    %50 = tpu.matmul %47, %48, %cst_22 {dimension_numbers = #tpu.dot_dimension_numbers<[1], [1], [0], [0], [0, 0, 1, 0], [], []>} : vector<8x8xf32>, vector<16x8xf32>, vector<8x16xf32> -> vector<8x16xf32>
    "tpu.trace_stop"() : () -> ()
    %51 = vector.broadcast %19 : vector<1x16xf32> to vector<8x16xf32>
    %52 = arith.addf %50, %51 : vector<8x16xf32>
    %cst_23 = arith.constant dense<0xFF800000> : vector<8xf32>
    %53 = vector.multi_reduction <maximumf>, %52, %cst_23 [1] : vector<8x16xf32> to vector<8xf32>
    %54 = vector.shape_cast %53 : vector<8xf32> to vector<8x1xf32>
    %55 = vector.broadcast %54 : vector<8x1xf32> to vector<8x16xf32>
    %56 = arith.subf %52, %55 : vector<8x16xf32>
    %57 = math.exp %56 : vector<8x16xf32>
    %cst_24 = arith.constant dense<0.000000e+00> : vector<8xf32>
    %58 = vector.multi_reduction <add>, %57, %cst_24 [1] : vector<8x16xf32> to vector<8xf32>
    %59 = vector.shape_cast %58 : vector<8xf32> to vector<8x1xf32>
    %60 = tpu.reciprocal %59 {approx = true} : vector<8x1xf32> -> vector<8x1xf32>
    %61 = vector.broadcast %60 : vector<8x1xf32> to vector<8x16xf32>
    %62 = arith.mulf %57, %61 : vector<8x16xf32>
    %cst_25 = arith.constant dense<0.000000e+00> : vector<8x8xf32>
    %63 = tpu.matmul %62, %49, %cst_25 {dimension_numbers = #tpu.dot_dimension_numbers<[1], [0], [0], [1], [0, 0, 1, 1], [], []>} : vector<8x16xf32>, vector<16x8xf32>, vector<8x8xf32> -> vector<8x8xf32>
    %64 = vector.broadcast %26 : f32 to vector<8x8xf32>
    %65 = arith.mulf %63, %64 : vector<8x8xf32>
    %c0_26 = arith.constant 0 : index
    %c8 = arith.constant 8 : index
    %66 = vector.load %arg9[%c0_26, %c8] : memref<8x32xf32, #tpu.memory_space<vmem>>, vector<8x8xf32>
    tpu.vector_store %arg9[%c0_26, %c8], %65 {strides = array<i32>} : memref<8x32xf32, #tpu.memory_space<vmem>>, vector<8x8xf32>,
    %67 = vector.extract_strided_slice %6 {offsets = [0, 16], sizes = [8, 8], strides = [1, 1]} : vector<8x32xf32> to vector<8x8xf32>
    %68 = vector.extract_strided_slice %9 {offsets = [0, 16], sizes = [16, 8], strides = [1, 1]} : vector<16x32xf32> to vector<16x8xf32>
    %69 = vector.extract_strided_slice %10 {offsets = [0, 16], sizes = [16, 8], strides = [1, 1]} : vector<16x32xf32> to vector<16x8xf32>
    "tpu.trace_start"() <{level = 10 : i32, message = "nd,ld->nl"}> : () -> ()
    %cst_27 = arith.constant dense<0.000000e+00> : vector<8x16xf32>
    %70 = tpu.matmul %67, %68, %cst_27 {dimension_numbers = #tpu.dot_dimension_numbers<[1], [1], [0], [0], [0, 0, 1, 0], [], []>} : vector<8x8xf32>, vector<16x8xf32>, vector<8x16xf32> -> vector<8x16xf32>
    "tpu.trace_stop"() : () -> ()
    %71 = vector.broadcast %19 : vector<1x16xf32> to vector<8x16xf32>
    %72 = arith.addf %70, %71 : vector<8x16xf32>
    %cst_28 = arith.constant dense<0xFF800000> : vector<8xf32>
    %73 = vector.multi_reduction <maximumf>, %72, %cst_28 [1] : vector<8x16xf32> to vector<8xf32>
    %74 = vector.shape_cast %73 : vector<8xf32> to vector<8x1xf32>
    %75 = vector.broadcast %74 : vector<8x1xf32> to vector<8x16xf32>
    %76 = arith.subf %72, %75 : vector<8x16xf32>
    %77 = math.exp %76 : vector<8x16xf32>
    %cst_29 = arith.constant dense<0.000000e+00> : vector<8xf32>
    %78 = vector.multi_reduction <add>, %77, %cst_29 [1] : vector<8x16xf32> to vector<8xf32>
    %79 = vector.shape_cast %78 : vector<8xf32> to vector<8x1xf32>
    %80 = tpu.reciprocal %79 {approx = true} : vector<8x1xf32> -> vector<8x1xf32>
    %81 = vector.broadcast %80 : vector<8x1xf32> to vector<8x16xf32>
    %82 = arith.mulf %77, %81 : vector<8x16xf32>
    %cst_30 = arith.constant dense<0.000000e+00> : vector<8x8xf32>
    %83 = tpu.matmul %82, %69, %cst_30 {dimension_numbers = #tpu.dot_dimension_numbers<[1], [0], [0], [1], [0, 0, 1, 1], [], []>} : vector<8x16xf32>, vector<16x8xf32>, vector<8x8xf32> -> vector<8x8xf32>
    %84 = vector.broadcast %26 : f32 to vector<8x8xf32>
    %85 = arith.mulf %83, %84 : vector<8x8xf32>
    %c0_31 = arith.constant 0 : index
    %c16 = arith.constant 16 : index
    %86 = vector.load %arg9[%c0_31, %c16] : memref<8x32xf32, #tpu.memory_space<vmem>>, vector<8x8xf32>
    tpu.vector_store %arg9[%c0_31, %c16], %85 {strides = array<i32>} : memref<8x32xf32, #tpu.memory_space<vmem>>, vector<8x8xf32>,
    %87 = vector.extract_strided_slice %6 {offsets = [0, 24], sizes = [8, 8], strides = [1, 1]} : vector<8x32xf32> to vector<8x8xf32>
    %88 = vector.extract_strided_slice %9 {offsets = [0, 24], sizes = [16, 8], strides = [1, 1]} : vector<16x32xf32> to vector<16x8xf32>
    %89 = vector.extract_strided_slice %10 {offsets = [0, 24], sizes = [16, 8], strides = [1, 1]} : vector<16x32xf32> to vector<16x8xf32>
    "tpu.trace_start"() <{level = 10 : i32, message = "nd,ld->nl"}> : () -> ()
    %cst_32 = arith.constant dense<0.000000e+00> : vector<8x16xf32>
    %90 = tpu.matmul %87, %88, %cst_32 {dimension_numbers = #tpu.dot_dimension_numbers<[1], [1], [0], [0], [0, 0, 1, 0], [], []>} : vector<8x8xf32>, vector<16x8xf32>, vector<8x16xf32> -> vector<8x16xf32>
    "tpu.trace_stop"() : () -> ()
    %91 = vector.broadcast %19 : vector<1x16xf32> to vector<8x16xf32>
    %92 = arith.addf %90, %91 : vector<8x16xf32>
    %cst_33 = arith.constant dense<0xFF800000> : vector<8xf32>
    %93 = vector.multi_reduction <maximumf>, %92, %cst_33 [1] : vector<8x16xf32> to vector<8xf32>
    %94 = vector.shape_cast %93 : vector<8xf32> to vector<8x1xf32>
    %95 = vector.broadcast %94 : vector<8x1xf32> to vector<8x16xf32>
    %96 = arith.subf %92, %95 : vector<8x16xf32>
    %97 = math.exp %96 : vector<8x16xf32>
    %cst_34 = arith.constant dense<0.000000e+00> : vector<8xf32>
    %98 = vector.multi_reduction <add>, %97, %cst_34 [1] : vector<8x16xf32> to vector<8xf32>
    %99 = vector.shape_cast %98 : vector<8xf32> to vector<8x1xf32>
    %100 = tpu.reciprocal %99 {approx = true} : vector<8x1xf32> -> vector<8x1xf32>
    %101 = vector.broadcast %100 : vector<8x1xf32> to vector<8x16xf32>
    %102 = arith.mulf %97, %101 : vector<8x16xf32>
    %cst_35 = arith.constant dense<0.000000e+00> : vector<8x8xf32>
    %103 = tpu.matmul %102, %89, %cst_35 {dimension_numbers = #tpu.dot_dimension_numbers<[1], [0], [0], [1], [0, 0, 1, 1], [], []>} : vector<8x16xf32>, vector<16x8xf32>, vector<8x8xf32> -> vector<8x8xf32>
    %104 = vector.broadcast %26 : f32 to vector<8x8xf32>
    %105 = arith.mulf %103, %104 : vector<8x8xf32>
    %c0_36 = arith.constant 0 : index
    %c24 = arith.constant 24 : index
    %106 = vector.load %arg9[%c0_36, %c24] : memref<8x32xf32, #tpu.memory_space<vmem>>, vector<8x8xf32>
    tpu.vector_store %arg9[%c0_36, %c24], %105 {strides = array<i32>} : memref<8x32xf32, #tpu.memory_space<vmem>>, vector<8x8xf32>,
    %c0_37 = arith.constant 0 : index
    %c0_38 = arith.constant 0 : index
    %107 = vector.load %arg9[%c0_37, %c0_38] : memref<8x32xf32, #tpu.memory_space<vmem>>, vector<8x32xf32>
    %c0_39 = arith.constant 0 : index
    %c0_40 = arith.constant 0 : index
    %108 = vector.load %arg6[%c0_39, %c0_40] : memref<32x32xf32, #tpu.memory_space<vmem>>, vector<32x32xf32>
    %cst_41 = arith.constant dense<0.000000e+00> : vector<8x32xf32>
    %109 = tpu.matmul %107, %108, %cst_41 {dimension_numbers = #tpu.dot_dimension_numbers<[1], [0], [0], [1], [0, 0, 1, 1], [], []>} : vector<8x32xf32>, vector<32x32xf32>, vector<8x32xf32> -> vector<8x32xf32>
    %c0_42 = arith.constant 0 : index
    %c0_43 = arith.constant 0 : index
    %110 = vector.load %arg7[%c0_42, %c0_43] : memref<1x32xf32, #tpu.memory_space<vmem>>, vector<1x32xf32>
    %111 = vector.broadcast %110 : vector<1x32xf32> to vector<8x32xf32>
    %112 = arith.addf %109, %111 : vector<8x32xf32>
    %c0_44 = arith.constant 0 : index
    %c0_45 = arith.constant 0 : index
    %113 = vector.load %arg8[%c0_44, %c0_45] : memref<8x32xf32, #tpu.memory_space<vmem>>, vector<8x32xf32>
    tpu.vector_store %arg8[%c0_44, %c0_45], %112 {strides = array<i32>} : memref<8x32xf32, #tpu.memory_space<vmem>>, vector<8x32xf32>,
    return
  }
  func.func @transform_0(%arg0: i32) -> (i32, i32) {
    %c0_i32 = arith.constant 0 : i32
    %c0_i32_0 = arith.constant 0 : i32
    return %arg0, %c0_i32 : i32, i32
  }
  func.func @transform_1(%arg0: i32) -> (i32, i32) {
    %c0_i32 = arith.constant 0 : i32
    %c0_i32_0 = arith.constant 0 : i32
    return %arg0, %c0_i32 : i32, i32
  }
  func.func @transform_2(%arg0: i32) -> (i32, i32) {
    %c0_i32 = arith.constant 0 : i32
    %c0_i32_0 = arith.constant 0 : i32
    %c0_i32_1 = arith.constant 0 : i32
    return %c0_i32, %c0_i32_0 : i32, i32
  }
  func.func @transform_3(%arg0: i32) -> (i32, i32) {
    %c0_i32 = arith.constant 0 : i32
    %c0_i32_0 = arith.constant 0 : i32
    %c0_i32_1 = arith.constant 0 : i32
    return %c0_i32, %c0_i32_0 : i32, i32
  }
  func.func @transform_4(%arg0: i32) -> (i32, i32) {
    %c0_i32 = arith.constant 0 : i32
    %c0_i32_0 = arith.constant 0 : i32
    %c0_i32_1 = arith.constant 0 : i32
    return %c0_i32, %c0_i32_0 : i32, i32
  }
  func.func @transform_5(%arg0: i32) -> (i32, i32) {
    %c0_i32 = arith.constant 0 : i32
    %c0_i32_0 = arith.constant 0 : i32
    %c0_i32_1 = arith.constant 0 : i32
    return %c0_i32, %c0_i32_0 : i32, i32
  }
  func.func @transform_6(%arg0: i32) -> (i32, i32) {
    %c0_i32 = arith.constant 0 : i32
    %c0_i32_0 = arith.constant 0 : i32
    %c0_i32_1 = arith.constant 0 : i32
    return %c0_i32, %c0_i32_0 : i32, i32
  }
  func.func @transform_7(%arg0: i32) -> (i32, i32) {
    %c0_i32 = arith.constant 0 : i32
    %c0_i32_0 = arith.constant 0 : i32
    return %arg0, %c0_i32 : i32, i32
  }
}

</mosaic_0001>

<llo_original>
// kernel: tpu_custom_call.1
$region0: #{tpu_custom_call.1}
  #allocation0 [shape = 'u32[]', space=smem, size = 0x4, offset = 0x4, fixed_abs, tag = 'smem constant byte address 0x4 - core index']
  #allocation1 [shape = 'u32[72,128]{1,0:T(1,128)}', space=vmem, size = 0x9000, scoped, tag = 'internal scratch']
  #allocation2 [shape = 'f32[8,32]{1,0:T(8,128)}', space=vmem, size = 0x1000, scoped, tag = 'scratch operand']
  %s0 = inlined_call_operand.hbm [shape: f32[16,32], index: 0, kind: input, shape index: {}]
  %s1 = inlined_call_operand.hbm [shape: f32[32,32], index: 1, kind: input, shape index: {}]
  %s2 = inlined_call_operand.hbm [shape: s32[2,16], index: 2, kind: input, shape index: {}]
  %s3 = inlined_call_operand.hbm [shape: f32[32,32], index: 3, kind: input, shape index: {}]
  %s4 = inlined_call_operand.hbm [shape: f32[32,64], index: 4, kind: input, shape index: {}]
  %s5 = inlined_call_operand.hbm [shape: f32[32,32], index: 5, kind: input, shape index: {}]
  %s6 = inlined_call_operand.vmem [shape: f32[1,32], index: 6, kind: input, shape index: {}]
  %s7 = inlined_call_operand.hbm [shape: f32[16,32], index: 7, kind: output, shape index: {}]
  %s8 = sld [smem:[#allocation0]]
  $region85: #{tpu_custom_call.1} parent=0
    _
  %s10 = ssub.s32 1, %s8
  %s11 = scalar_select 0, %s10, %s8
  $region1: #{tpu_custom_call.1} parent=0
    #allocation3 [shape = 'u8[8192]{0}', space=vmem, size = 0x2000, scoped, tag = 'input window, operand 0']
    #allocation4 [shape = 's32[2]{0}', space=sflag, size = 0x8, scoped, tag = 'scoped memory for tpu_custom_call.1']
    #allocation5 [shape = 's32[2]{0}', space=sflag, size = 0x8, scoped, tag = 'scoped memory for tpu_custom_call.1']
    #allocation6 [shape = 'u8[16384]{0}', space=vmem, size = 0x4000, scoped, tag = 'input window, operand 1']
    #allocation7 [shape = 's32[2]{0}', space=sflag, size = 0x8, scoped, tag = 'scoped memory for tpu_custom_call.1']
    #allocation8 [shape = 'u8[1024]{0}', space=vmem, size = 0x400, scoped, tag = 'input window, operand 2, single buffered']
    #allocation9 [shape = 'u8[16384]{0}', space=vmem, size = 0x4000, scoped, tag = 'input window, operand 3, single buffered']
    #allocation10 [shape = 's32[1]{0}', space=sflag, size = 0x4, scoped, tag = 'scoped memory for tpu_custom_call.1']
    #allocation11 [shape = 'u8[16384]{0}', space=vmem, size = 0x4000, scoped, tag = 'input window, operand 4, single buffered']
    #allocation12 [shape = 'u8[16384]{0}', space=vmem, size = 0x4000, scoped, tag = 'input window, operand 5, single buffered']
    #allocation13 [shape = 's32[1]{0}', space=sflag, size = 0x4, scoped, tag = 'scoped memory for tpu_custom_call.1']
    #allocation14 [shape = 'u8[8192]{0}', space=vmem, size = 0x2000, scoped, tag = 'output window, operand 0']
    %12 = vsyncpa [#allocation4], 0
    %s13 = scalar_lea.sflag [#allocation4], 1
    %14 = vsyncpa %s13, 0
    %15 = vsyncpa [#allocation7], 0
    %s16 = scalar_lea.sflag [#allocation7], 1
    %17 = vsyncpa %s16, 0
    %18 = vsyncpa [#allocation10], 0
    %19 = vsyncpa [#allocation13], 0
    %20 = vsyncpa [#allocation5], 0
    %s21 = scalar_lea.sflag [#allocation5], 1
    %22 = vsyncpa %s21, 0
    loop: start=0, step=1, limit=4
    $region2: #{tpu_custom_call.1} parent=1 // loop_pre_header
      _
    $region3: #{tpu_custom_call.1} parent=1 // loop_header
      %s24 = sphi 0, %s28
      %p25 = scmp.ge.s32.totalorder %s24, 4
      %s34 = sphi 0, %s36
      %s37 = sphi 0, %s34
      %s38 = sphi 0, %s37
      %s54 = sphi 0, %s38
      %s60 = sphi 0, %s62
      %s63 = sphi 0, %s60
      %s64 = sphi 0, %s63
      %s80 = sphi 0, %s64
      %s84 = sphi 0, %s84
      %s86 = sphi 0, %s84
      %s87 = sphi 0, %s86
      %s101 = sphi 0, %s87
      %s105 = sphi 0, %s105
      %s107 = sphi 0, %s105
      %s108 = sphi 0, %s107
      %s122 = sphi 0, %s108
      %s126 = sphi 0, %s126
      %s128 = sphi 0, %s126
      %s129 = sphi 0, %s128
      %s143 = sphi 0, %s129
      %s147 = sphi 0, %s147
      %s149 = sphi 0, %s147
      %s150 = sphi 0, %s149
      %s164 = sphi 0, %s150
      %s168 = sphi 0, %s168
      %s170 = sphi 0, %s168
      %s171 = sphi 0, %s170
      %s185 = sphi 0, %s171
      %s191 = sphi 0, %s193
      %s194 = sphi 0, %s191
      %s195 = sphi 0, %s194
      %s211 = sphi 0, %s195
    $region4: #{tpu_custom_call.1} parent=1 // loop_header_branch
      %27 = sbr.rel (%p25) target = $region8
    $region5: #{tpu_custom_call.1} parent=1 // loop_body
      %s29 = ssub.s32 %s24, 1
      %s30 = ssub.s32 %s24, 2
      %s31 = sadd.s32 %s24, 1
      %s32 = ssub.s32 %s24, %s31
      %p33 = scmp.eq.s32.totalorder %s32, 0
      %s35 = sadd.s32 %s34, 1
      %s36 = scalar_select %p33, %s34, %s35
      %p39 = pneg %p33
      %p40 = scmp.eq.s32.totalorder %s24, 1
      %p41 = por %p39, %p40
      %p42 = scmp.ne.s32.totalorder %s34, %s37
      %p43 = scmp.eq.s32.totalorder %s24, 0
      %p44 = por %p42, %p43
      %p45 = scmp.ne.s32.totalorder %s34, %s37
      %p46 = scmp.eq.s32.totalorder %s29, 1
      %p47 = por %p45, %p46
      %p48 = scmp.ne.s32.totalorder %s37, %s38
      %p49 = scmp.eq.s32.totalorder %s29, 0
      %p50 = por %p48, %p49
      %p51 = scmp.ne.s32.totalorder %s37, %s38
      %p52 = scmp.eq.s32.totalorder %s30, 1
      %p53 = por %p51, %p52
      %p55 = scmp.ne.s32.totalorder %s38, %s54
      %p56 = scmp.eq.s32.totalorder %s30, 0
      %p57 = por %p55, %p56
      %s58 = ssub.s32 %s24, %s31
      %p59 = scmp.eq.s32.totalorder %s58, 0
      %s61 = sadd.s32 %s60, 1
      %s62 = scalar_select %p59, %s60, %s61
      %p65 = pneg %p59
      %p66 = scmp.eq.s32.totalorder %s24, 1
      %p67 = por %p65, %p66
      %p68 = scmp.ne.s32.totalorder %s60, %s63
      %p69 = scmp.eq.s32.totalorder %s24, 0
      %p70 = por %p68, %p69
      %p71 = scmp.ne.s32.totalorder %s60, %s63
      %p72 = scmp.eq.s32.totalorder %s29, 1
      %p73 = por %p71, %p72
      %p74 = scmp.ne.s32.totalorder %s63, %s64
      %p75 = scmp.eq.s32.totalorder %s29, 0
      %p76 = por %p74, %p75
      %p77 = scmp.ne.s32.totalorder %s63, %s64
      %p78 = scmp.eq.s32.totalorder %s30, 1
      %p79 = por %p77, %p78
      %p81 = scmp.ne.s32.totalorder %s64, %s80
      %p82 = scmp.eq.s32.totalorder %s30, 0
      %p83 = por %p81, %p82
      %s85 = sadd.s32 %s84, 1
      %p88 = scmp.eq.s32.totalorder %s24, 1
      %p89 = scmp.ne.s32.totalorder %s84, %s86
      %p90 = scmp.eq.s32.totalorder %s24, 0
      %p91 = por %p89, %p90
      %p92 = scmp.ne.s32.totalorder %s84, %s86
      %p93 = scmp.eq.s32.totalorder %s29, 1
      %p94 = por %p92, %p93
      %p95 = scmp.ne.s32.totalorder %s86, %s87
      %p96 = scmp.eq.s32.totalorder %s29, 0
      %p97 = por %p95, %p96
      %p98 = scmp.ne.s32.totalorder %s86, %s87
      %p99 = scmp.eq.s32.totalorder %s30, 1
      %p100 = por %p98, %p99
      %p102 = scmp.ne.s32.totalorder %s87, %s101
      %p103 = scmp.eq.s32.totalorder %s30, 0
      %p104 = por %p102, %p103
      %s106 = sadd.s32 %s105, 1
      %p109 = scmp.eq.s32.totalorder %s24, 1
      %p110 = scmp.ne.s32.totalorder %s105, %s107
      %p111 = scmp.eq.s32.totalorder %s24, 0
      %p112 = por %p110, %p111
      %p113 = scmp.ne.s32.totalorder %s105, %s107
      %p114 = scmp.eq.s32.totalorder %s29, 1
      %p115 = por %p113, %p114
      %p116 = scmp.ne.s32.totalorder %s107, %s108
      %p117 = scmp.eq.s32.totalorder %s29, 0
      %p118 = por %p116, %p117
      %p119 = scmp.ne.s32.totalorder %s107, %s108
      %p120 = scmp.eq.s32.totalorder %s30, 1
      %p121 = por %p119, %p120
      %p123 = scmp.ne.s32.totalorder %s108, %s122
      %p124 = scmp.eq.s32.totalorder %s30, 0
      %p125 = por %p123, %p124
      %s127 = sadd.s32 %s126, 1
      %p130 = scmp.eq.s32.totalorder %s24, 1
      %p131 = scmp.ne.s32.totalorder %s126, %s128
      %p132 = scmp.eq.s32.totalorder %s24, 0
      %p133 = por %p131, %p132
      %p134 = scmp.ne.s32.totalorder %s126, %s128
      %p135 = scmp.eq.s32.totalorder %s29, 1
      %p136 = por %p134, %p135
      %p137 = scmp.ne.s32.totalorder %s128, %s129
      %p138 = scmp.eq.s32.totalorder %s29, 0
      %p139 = por %p137, %p138
      %p140 = scmp.ne.s32.totalorder %s128, %s129
      %p141 = scmp.eq.s32.totalorder %s30, 1
      %p142 = por %p140, %p141
      %p144 = scmp.ne.s32.totalorder %s129, %s143
      %p145 = scmp.eq.s32.totalorder %s30, 0
      %p146 = por %p144, %p145
      %s148 = sadd.s32 %s147, 1
      %p151 = scmp.eq.s32.totalorder %s24, 1
      %p152 = scmp.ne.s32.totalorder %s147, %s149
      %p153 = scmp.eq.s32.totalorder %s24, 0
      %p154 = por %p152, %p153
      %p155 = scmp.ne.s32.totalorder %s147, %s149
      %p156 = scmp.eq.s32.totalorder %s29, 1
      %p157 = por %p155, %p156
      %p158 = scmp.ne.s32.totalorder %s149, %s150
      %p159 = scmp.eq.s32.totalorder %s29, 0
      %p160 = por %p158, %p159
      %p161 = scmp.ne.s32.totalorder %s149, %s150
      %p162 = scmp.eq.s32.totalorder %s30, 1
      %p163 = por %p161, %p162
      %p165 = scmp.ne.s32.totalorder %s150, %s164
      %p166 = scmp.eq.s32.totalorder %s30, 0
      %p167 = por %p165, %p166
      %s169 = sadd.s32 %s168, 1
      %p172 = scmp.eq.s32.totalorder %s24, 1
      %p173 = scmp.ne.s32.totalorder %s168, %s170
      %p174 = scmp.eq.s32.totalorder %s24, 0
      %p175 = por %p173, %p174
      %p176 = scmp.ne.s32.totalorder %s168, %s170
      %p177 = scmp.eq.s32.totalorder %s29, 1
      %p178 = por %p176, %p177
      %p179 = scmp.ne.s32.totalorder %s170, %s171
      %p180 = scmp.eq.s32.totalorder %s29, 0
      %p181 = por %p179, %p180
      %p182 = scmp.ne.s32.totalorder %s170, %s171
      %p183 = scmp.eq.s32.totalorder %s30, 1
      %p184 = por %p182, %p183
      %p186 = scmp.ne.s32.totalorder %s171, %s185
      %p187 = scmp.eq.s32.totalorder %s30, 0
      %p188 = por %p186, %p187
      %s189 = ssub.s32 %s24, %s31
      %p190 = scmp.eq.s32.totalorder %s189, 0
      %s192 = sadd.s32 %s191, 1
      %s193 = scalar_select %p190, %s191, %s192
      %p196 = pneg %p190
      %p197 = scmp.eq.s32.totalorder %s24, 1
      %p198 = por %p196, %p197
      %p199 = scmp.ne.s32.totalorder %s191, %s194
      %p200 = scmp.eq.s32.totalorder %s24, 0
      %p201 = por %p199, %p200
      %p202 = scmp.ne.s32.totalorder %s191, %s194
      %p203 = scmp.eq.s32.totalorder %s29, 1
      %p204 = por %p202, %p203
      %p205 = scmp.ne.s32.totalorder %s194, %s195
      %p206 = scmp.eq.s32.totalorder %s29, 0
      %p207 = por %p205, %p206
      %p208 = scmp.ne.s32.totalorder %s194, %s195
      %p209 = scmp.eq.s32.totalorder %s30, 1
      %p210 = por %p208, %p209
      %p212 = scmp.ne.s32.totalorder %s195, %s211
      %p213 = scmp.eq.s32.totalorder %s30, 0
      %p214 = por %p212, %p213
      %p215 = scmp.le.s32.totalorder 1, %s24
      %p216 = scmp.lt.s32.totalorder %s24, 3
      %p217 = pnand %p215, %p216
      %p218 = pneg %p217
      // Predicated region
      $region9: #{tpu_custom_call.1} parent=5 // pred_check
        _
      $region10: #{tpu_custom_call.1} parent=5 // pred_check_branch
        %220 = sbr.rel (%p217) target = $region12
      $region11: #{tpu_custom_call.1} parent=5 // pred_region
        %s221 = ssub.s32 %s24, 1
        // Predicated region
        $region13: #{tpu_custom_call.1} parent=11 // pred_check
          %p222 = pneg %p97
        $region14: #{tpu_custom_call.1} parent=11 // pred_check_branch
          %224 = sbr.rel (%p222) target = $region16
        $region15: #{tpu_custom_call.1} parent=11 // pred_region
          %226 = vsyncadd [#allocation7], 0
          %s228 = sshll.u32 %s2, 4
          %s229 = int_to_ptr.hbm [resolvable:$true] %s228
          %s230 = sshll.u32 [#allocation8], 4
          %s231 = int_to_ptr.vmem [resolvable:$true] %s230
          %233 = dma.hbm_to_vmem [thread:$0]  %s229, 32, %s231, [#allocation7]
        $region16: #{tpu_custom_call.1} parent=11 // pred_fallthru
          _
        // Predicated region
        $region17: #{tpu_custom_call.1} parent=11 // pred_check
          %p234 = pneg %p118
        $region18: #{tpu_custom_call.1} parent=11 // pred_check_branch
          %236 = sbr.rel (%p234) target = $region20
        $region19: #{tpu_custom_call.1} parent=11 // pred_region
          %238 = vsyncadd [#allocation10], 0
          %s239 = sshll.u32 %s3, 4
          %s240 = int_to_ptr.hbm [resolvable:$true] %s239
          %s241 = sshll.u32 [#allocation9], 4
          %s242 = int_to_ptr.vmem [resolvable:$true] %s241
          %247 = dma.hbm_to_vmem [thread:$0]  %s240, 512, %s242, [#allocation10], 128, 128, 8
        $region20: #{tpu_custom_call.1} parent=11 // pred_fallthru
          _
        // Predicated region
        $region21: #{tpu_custom_call.1} parent=11 // pred_check
          %p248 = pneg %p139
        $region22: #{tpu_custom_call.1} parent=11 // pred_check_branch
          %250 = sbr.rel (%p248) target = $region24
        $region23: #{tpu_custom_call.1} parent=11 // pred_region
          %252 = vsyncadd [#allocation10], 0
          %s253 = sshll.u32 %s4, 4
          %s254 = int_to_ptr.hbm [resolvable:$true] %s253
          %s255 = sshll.u32 [#allocation11], 4
          %s256 = int_to_ptr.vmem [resolvable:$true] %s255
          %261 = dma.hbm_to_vmem [thread:$0]  %s254, 512, %s256, [#allocation10], 128, 128, 8
        $region24: #{tpu_custom_call.1} parent=11 // pred_fallthru
          _
        // Predicated region
        $region25: #{tpu_custom_call.1} parent=11 // pred_check
          %p262 = pneg %p160
        $region26: #{tpu_custom_call.1} parent=11 // pred_check_branch
          %264 = sbr.rel (%p262) target = $region28
        $region27: #{tpu_custom_call.1} parent=11 // pred_region
          %266 = vsyncadd [#allocation13], 0
          %s267 = sshll.u32 %s5, 4
          %s268 = int_to_ptr.hbm [resolvable:$true] %s267
          %s269 = sshll.u32 [#allocation12], 4
          %s270 = int_to_ptr.vmem [resolvable:$true] %s269
          %275 = dma.hbm_to_vmem [thread:$0]  %s268, 512, %s270, [#allocation13], 128, 128, 8
        $region28: #{tpu_custom_call.1} parent=11 // pred_fallthru
          _
        // Predicated region
        $region29: #{tpu_custom_call.1} parent=11 // pred_check
          %p276 = pneg %p181
        $region30: #{tpu_custom_call.1} parent=11 // pred_check_branch
          %278 = sbr.rel (%p276) target = $region32
        $region31: #{tpu_custom_call.1} parent=11 // pred_region
          _
        $region32: #{tpu_custom_call.1} parent=11 // pred_fallthru
          _
      $region12: #{tpu_custom_call.1} parent=5 // pred_fallthru
        _
      %p279 = scmp.lt.s32.totalorder %s24, 2
      // Predicated region
      $region33: #{tpu_custom_call.1} parent=5 // pred_check
        %p280 = pneg %p279
      $region34: #{tpu_custom_call.1} parent=5 // pred_check_branch
        %282 = sbr.rel (%p280) target = $region36
      $region35: #{tpu_custom_call.1} parent=5 // pred_region
        // Predicated region
        $region37: #{tpu_custom_call.1} parent=35 // pred_check
          %p283 = pneg %p44
        $region38: #{tpu_custom_call.1} parent=35 // pred_check_branch
          %285 = sbr.rel (%p283) target = $region40
        $region39: #{tpu_custom_call.1} parent=35 // pred_region
          %s286 = sand.u32 %s34, 1
          %s287 = scalar_lea.sflag [#allocation4], %s286
          %s288 = sand.u32 %s34, 1
          %s289 = smul.addr %s288, 8
          %s290 = scalar_lea.vmem [#allocation3], %s289
          %292 = vsyncadd %s287, 0
          %s293 = smul.addr %s24, 8
          %s294 = scalar_lea.hbm %s0, %s293
          %s296 = sshll.u32 %s294, 4
          %s297 = int_to_ptr.hbm [resolvable:$true] %s296
          %s298 = sshll.u32 %s290, 4
          %s299 = int_to_ptr.vmem [resolvable:$true] %s298
          %301 = dma.hbm_to_vmem [thread:$0]  %s297, 128, %s299, %s287
        $region40: #{tpu_custom_call.1} parent=35 // pred_fallthru
          _
        // Predicated region
        $region41: #{tpu_custom_call.1} parent=35 // pred_check
          %p302 = pneg %p70
        $region42: #{tpu_custom_call.1} parent=35 // pred_check_branch
          %304 = sbr.rel (%p302) target = $region44
        $region43: #{tpu_custom_call.1} parent=35 // pred_region
          %s305 = sand.u32 %s24, 1
          %s306 = scalar_lea.sflag [#allocation7], %s305
          %s307 = sand.u32 %s60, 1
          %s308 = smul.addr %s307, 16
          %s309 = scalar_lea.vmem [#allocation6], %s308
          %s310 = smul.u32 2, %s24
          %312 = vsyncadd %s306, 0
          %s313 = smul.addr %s310, 8
          %s314 = scalar_lea.hbm %s1, %s313
          %s315 = sshll.u32 %s314, 4
          %s316 = int_to_ptr.hbm [resolvable:$true] %s315
          %s317 = sshll.u32 %s309, 4
          %s318 = int_to_ptr.vmem [resolvable:$true] %s317
          %323 = dma.hbm_to_vmem [thread:$0]  %s316, 256, %s318, %s306, 128, 128, 8
        $region44: #{tpu_custom_call.1} parent=35 // pred_fallthru
          _
      $region36: #{tpu_custom_call.1} parent=5 // pred_fallthru
        _
      %p324 = scmp.le.s32.totalorder 1, %s24
      %p325 = scmp.lt.s32.totalorder %s24, 3
      %p326 = pnand %p324, %p325
      %p327 = pneg %p326
      // Predicated region
      $region45: #{tpu_custom_call.1} parent=5 // pred_check
        _
      $region46: #{tpu_custom_call.1} parent=5 // pred_check_branch
        %329 = sbr.rel (%p326) target = $region48
      $region47: #{tpu_custom_call.1} parent=5 // pred_region
        %s330 = ssub.s32 %s24, 1
        %s331 = sand.u32 %s37, 1
        %s332 = scalar_lea.sflag [#allocation4], %s331
        %s333 = sand.u32 %s37, 1
        %s334 = smul.addr %s333, 8
        %s335 = scalar_lea.vmem [#allocation3], %s334
        // Predicated region
        $region49: #{tpu_custom_call.1} parent=47 // pred_check
          %p336 = pneg %p50
        $region50: #{tpu_custom_call.1} parent=47 // pred_check_branch
          %338 = sbr.rel (%p336) target = $region52
        $region51: #{tpu_custom_call.1} parent=47 // pred_region
          %340 = dma.done %s332, 128
        $region52: #{tpu_custom_call.1} parent=47 // pred_fallthru
          _
        %s341 = sand.u32 %s29, 1
        %s342 = scalar_lea.sflag [#allocation7], %s341
        %s343 = sand.u32 %s63, 1
        %s344 = smul.addr %s343, 16
        %s345 = scalar_lea.vmem [#allocation6], %s344
        // Predicated region
        $region53: #{tpu_custom_call.1} parent=47 // pred_check
          %p346 = pneg %p76
        $region54: #{tpu_custom_call.1} parent=47 // pred_check_branch
          %348 = sbr.rel (%p346) target = $region56
        $region55: #{tpu_custom_call.1} parent=47 // pred_region
          %350 = dma.done %s342, 256
        $region56: #{tpu_custom_call.1} parent=47 // pred_fallthru
          _
        // Predicated region
        $region57: #{tpu_custom_call.1} parent=47 // pred_check
          %p351 = pneg %p97
        $region58: #{tpu_custom_call.1} parent=47 // pred_check_branch
          %353 = sbr.rel (%p351) target = $region60
        $region59: #{tpu_custom_call.1} parent=47 // pred_region
          %355 = dma.done [#allocation7], 32
        $region60: #{tpu_custom_call.1} parent=47 // pred_fallthru
          _
        // Predicated region
        $region61: #{tpu_custom_call.1} parent=47 // pred_check
          %p356 = pneg %p118
        $region62: #{tpu_custom_call.1} parent=47 // pred_check_branch
          %358 = sbr.rel (%p356) target = $region64
        $region63: #{tpu_custom_call.1} parent=47 // pred_region
          %360 = dma.done [#allocation10], 512
        $region64: #{tpu_custom_call.1} parent=47 // pred_fallthru
          _
        // Predicated region
        $region65: #{tpu_custom_call.1} parent=47 // pred_check
          %p361 = pneg %p139
        $region66: #{tpu_custom_call.1} parent=47 // pred_check_branch
          %363 = sbr.rel (%p361) target = $region68
        $region67: #{tpu_custom_call.1} parent=47 // pred_region
          %365 = dma.done [#allocation10], 512
        $region68: #{tpu_custom_call.1} parent=47 // pred_fallthru
          _
        // Predicated region
        $region69: #{tpu_custom_call.1} parent=47 // pred_check
          %p366 = pneg %p160
        $region70: #{tpu_custom_call.1} parent=47 // pred_check_branch
          %368 = sbr.rel (%p366) target = $region72
        $region71: #{tpu_custom_call.1} parent=47 // pred_region
          %370 = dma.done [#allocation13], 512
        $region72: #{tpu_custom_call.1} parent=47 // pred_fallthru
          _
        %s371 = sand.u32 %s37, 1
        %s372 = scalar_lea.sflag [#allocation4], %s371
        %s373 = sand.u32 %s37, 1
        %s374 = smul.addr %s373, 8
        %s375 = scalar_lea.vmem [#allocation3], %s374
        %p376 = pneg %p50
        %p377 = pneg %p47
        %s378 = sand.u32 %s29, 1
        %s379 = scalar_lea.sflag [#allocation7], %s378
        %s380 = sand.u32 %s63, 1
        %s381 = smul.addr %s380, 16
        %s382 = scalar_lea.vmem [#allocation6], %s381
        %p383 = pneg %p76
        %p384 = pneg %p73
        %p385 = pneg %p97
        %p386 = pneg %p94
        %p387 = pneg %p118
        %p388 = pneg %p115
        %p389 = pneg %p139
        %p390 = pneg %p136
        %p391 = pneg %p160
        %p392 = pneg %p157
        %p393 = pneg %p181
        %p394 = pneg %p178
        %p395 = pneg %p207
        %p396 = pneg %p204
        %s397 = sand.u32 %s194, 1
        %s398 = scalar_lea.sflag [#allocation5], %s397
        %s399 = sand.u32 %s194, 1
        %s400 = smul.addr %s399, 8
        %s401 = scalar_lea.vmem [#allocation14], %s400
        %s402 = smul.u32 2, %s29
        %v403 = vld [vmem:[%s335] sm:$0xff]
        %v404 = vld [vmem:[%s345] sm:$0xff]
        %v405 = vld [vmem:[%s345 + $0x8] sm:$0xff]
        %v406 = vld [vmem:[#allocation9] sm:$0xff]
        %v407 = vld [vmem:[#allocation9 + $0x8] sm:$0xff]
        %v408 = vld [vmem:[#allocation9 + $0x10] sm:$0xff]
        %v409 = vld [vmem:[#allocation9 + $0x18] sm:$0xff]
        %vm410 = vcmask 261120
        %v412 = vsel %vm410, %v403, 0
        %414 = vmatpush.msra.mxu0 0.0
        %415 = vmatpush.msra.mxu0 0.0
        %416 = vmatpush.msra.mxu0 0.0
        %417 = vmatpush.msra.mxu0 0.0
        %418 = vmatpush.msra.mxu0 0.0
        %419 = vmatpush.msra.mxu0 0.0
        %420 = vmatpush.msra.mxu0 0.0
        %421 = vmatpush.msra.mxu0 0.0
        %422 = vmatpush.msra.mxu0 0.0
        %423 = vmatpush.msra.mxu0 0.0
        %424 = vmatpush.msra.mxu0 0.0
        %425 = vmatpush.msra.mxu0 0.0
        %426 = vmatpush.msra.mxu0 %v409
        %427 = vmatpush.msra.mxu0 %v408
        %428 = vmatpush.msra.mxu0 %v407
        %429 = vmatpush.msra.mxu0 %v406
        %430 = vmatmul.f32.gmra.mxu0 %v412
        %v431 = vpop.f32.mrf.mxu0
        %v432 = vadd.f32 0.0, %v431
        %433 = vdwg.mxu0
        %v434 = vmul.f32 %v432, 0.35355338
        %v435 = vld [vmem:[#allocation11] sm:$0xff]
        %v436 = vld [vmem:[#allocation11 + $0x8] sm:$0xff]
        %v437 = vld [vmem:[#allocation11 + $0x10] sm:$0xff]
        %v438 = vld [vmem:[#allocation11 + $0x18] sm:$0xff]
        %v440 = vsel %vm410, %v404, 0
        %v443 = vsel %vm410, %v405, 0
        %445 = vmatpush.msra.mxu0 0.0
        %446 = vmatpush.msra.mxu0 0.0
        %447 = vmatpush.msra.mxu0 0.0
        %448 = vmatpush.msra.mxu0 0.0
        %449 = vmatpush.msra.mxu0 0.0
        %450 = vmatpush.msra.mxu0 0.0
        %451 = vmatpush.msra.mxu0 0.0
        %452 = vmatpush.msra.mxu0 0.0
        %453 = vmatpush.msra.mxu0 0.0
        %454 = vmatpush.msra.mxu0 0.0
        %455 = vmatpush.msra.mxu0 0.0
        %456 = vmatpush.msra.mxu0 0.0
        %457 = vmatpush.msra.mxu0 %v438
        %458 = vmatpush.msra.mxu0 %v437
        %459 = vmatpush.msra.mxu0 %v436
        %460 = vmatpush.msra.mxu0 %v435
        %461 = vmatmul.f32.gmra.mxu0 %v440
        %v462 = vpop.f32.mrf.mxu0
        %v463 = vadd.f32 0.0, %v462
        %464 = vmatmul.f32.gmra.mxu0 %v443
        %v465 = vpop.f32.mrf.mxu0
        %v466 = vadd.f32 0.0, %v465
        %467 = vdwg.mxu0
        %s468 = scalar_lea.vmem [#allocation8], %s29
        %v469 = vld [vmem:[%s468] sm:$0x1]
        %vm470 = vcmp.gt.s32.totalorder %v469, 0
        %v471 = vsel %vm470, 0.0, -1e+30
        %vm472 = vcmask 122880
        %v473 = vsel %vm472, %v469, 0
        %v474 = vand.u32 %v473, 65535
        %v475 = vshrl.u32 %v473, 16
        %v476 = vcvt.s32.f32 %v474
        %v477 = vcvt.s32.f32 %v475
        %478 = vadd.xlane.f32.xlu0 %v476
        %v479 = vpop.xlane.xlu0 %478
        %480 = vadd.xlane.f32.xlu0 %v477
        %v481 = vpop.xlane.xlu0 %480
        %v482 = vcvt.f32.s32 %v479
        %v483 = vcvt.f32.s32 %v481
        %v484 = vshll.u32 %v483, 16
        %v485 = vadd.s32 %v484, %v482
        %v486 = vrot.slane %v485, 4
        %v487 = vadd.s32 %v485, %v486
        %v488 = vrot.slane %v487, 2
        %v489 = vadd.s32 %v487, %v488
        %v490 = vrot.slane %v489, 1
        %v491 = vadd.s32 %v489, %v490
        %s492 = vtos %v491
        %p493 = scmp.gt.s32.totalorder %s492, 0
        %s494 = scalar_select %p493, 1, 0
        %s495 = scvt.s32.f32 %s494
        %v496 = vperm.slane %v471, 0
        %vm497 = vcmask 64512
        %v499 = vsel %vm497, %v434, 0
        %v502 = vsel %vm497, %v463, 0
        %v505 = vsel %vm497, %v466, 0
        %507 = vmatpush.xpose.msra.mxu0 0.0
        %508 = vmatpush.xpose.msra.mxu0 0.0
        %509 = vmatpush.xpose.msra.mxu0 0.0
        %510 = vmatpush.xpose.msra.mxu0 0.0
        %511 = vmatpush.xpose.msra.mxu0 0.0
        %512 = vmatpush.xpose.msra.mxu0 0.0
        %513 = vmatpush.xpose.msra.mxu0 0.0
        %514 = vmatpush.xpose.msra.mxu0 0.0
        %515 = vmatpush.xpose.msra.mxu0 0.0
        %516 = vmatpush.xpose.msra.mxu0 0.0
        %517 = vmatpush.xpose.msra.mxu0 0.0
        %518 = vmatpush.xpose.msra.mxu0 0.0
        %519 = vmatpush.xpose.msra.mxu0 0.0
        %520 = vmatpush.xpose.msra.mxu0 0.0
        %521 = vmatpush.xpose.msra.mxu0 %v505
        %522 = vmatpush.xpose.msra.mxu0 %v502
        %523 = vmatmul.f32.gmra.mxu0 %v499
        %v524 = vpop.f32.mrf.mxu0
        %v525 = vadd.f32 %v496, %v524
        %526 = vdwg.mxu0
        %vm527 = vcmask 130048
        %v528 = vsel %vm527, %v525, -inf
        %529 = vmax.xlane.f32.xlu0 %v528
        %v530 = vpop.xlane.xlu0 %529
        %v531 = vsub.f32 %v525, %v530
        %v532 = vmul.f32 %v531, 1.442695
        %v533 = vpow.pop %v532
        %v534 = vsel %vm527, %v533, 0.0
        %535 = vadd.xlane.f32.xlu0 %v534
        %v536 = vpop.xlane.xlu0 %535
        %v537 = vrcp.pop %v536
        %v538 = vmul.f32 %v533, %v537
        %539 = vrot.lane.b32.xlu0 %v463, 96
        %v540 = vpop.permute.xlu0 %539
        %541 = vrot.lane.b32.xlu0 %v466, 96
        %v542 = vpop.permute.xlu0 %541
        %v546 = vsel %vm527, %v538, 0
        %548 = vmatpush.msra.mxu0 0.0
        %549 = vmatpush.msra.mxu0 0.0
        %550 = vmatpush.msra.mxu0 0.0
        %551 = vmatpush.msra.mxu0 0.0
        %552 = vmatpush.msra.mxu0 0.0
        %553 = vmatpush.msra.mxu0 0.0
        %554 = vmatpush.msra.mxu0 0.0
        %555 = vmatpush.msra.mxu0 0.0
        %556 = vmatpush.msra.mxu0 0.0
        %557 = vmatpush.msra.mxu0 0.0
        %558 = vmatpush.msra.mxu0 0.0
        %559 = vmatpush.msra.mxu0 0.0
        %560 = vmatpush.msra.mxu0 0.0
        %561 = vmatpush.msra.mxu0 0.0
        %562 = vmatpush.msra.mxu0 %v542
        %563 = vmatpush.msra.mxu0 %v540
        %564 = vmatmul.f32.gmra.mxu0 %v546
        %v565 = vpop.f32.mrf.mxu0
        %v566 = vadd.f32 0.0, %v565
        %567 = vdwg.mxu0
        %v568 = vstv %s495
        %v569 = vmul.f32 %v566, %v568
        %570 = vst.msk [vmem:[#allocation2] sm:$0xff] %vm497, %v569
        %571 = vrot.lane.b32.xlu0 %v434, 120
        %v572 = vpop.permute.xlu0 %571
        %573 = vrot.lane.b32.xlu0 %v463, 120
        %v574 = vpop.permute.xlu0 %573
        %575 = vrot.lane.b32.xlu0 %v466, 120
        %v576 = vpop.permute.xlu0 %575
        %v577 = vsel %vm497, %v572, 0
        %v579 = vsel %vm497, %v574, 0
        %v581 = vsel %vm497, %v576, 0
        %583 = vmatpush.xpose.msra.mxu0 0.0
        %584 = vmatpush.xpose.msra.mxu0 0.0
        %585 = vmatpush.xpose.msra.mxu0 0.0
        %586 = vmatpush.xpose.msra.mxu0 0.0
        %587 = vmatpush.xpose.msra.mxu0 0.0
        %588 = vmatpush.xpose.msra.mxu0 0.0
        %589 = vmatpush.xpose.msra.mxu0 0.0
        %590 = vmatpush.xpose.msra.mxu0 0.0
        %591 = vmatpush.xpose.msra.mxu0 0.0
        %592 = vmatpush.xpose.msra.mxu0 0.0
        %593 = vmatpush.xpose.msra.mxu0 0.0
        %594 = vmatpush.xpose.msra.mxu0 0.0
        %595 = vmatpush.xpose.msra.mxu0 0.0
        %596 = vmatpush.xpose.msra.mxu0 0.0
        %597 = vmatpush.xpose.msra.mxu0 %v581
        %598 = vmatpush.xpose.msra.mxu0 %v579
        %599 = vmatmul.f32.gmra.mxu0 %v577
        %v600 = vpop.f32.mrf.mxu0
        %v601 = vadd.f32 %v496, %v600
        %602 = vdwg.mxu0
        %v603 = vsel %vm527, %v601, -inf
        %604 = vmax.xlane.f32.xlu0 %v603
        %v605 = vpop.xlane.xlu0 %604
        %v606 = vsub.f32 %v601, %v605
        %v607 = vmul.f32 %v606, 1.442695
        %v608 = vpow.pop %v607
        %v609 = vsel %vm527, %v608, 0.0
        %610 = vadd.xlane.f32.xlu0 %v609
        %v611 = vpop.xlane.xlu0 %610
        %v612 = vrcp.pop %v611
        %v613 = vmul.f32 %v608, %v612
        %614 = vrot.lane.b32.xlu0 %v463, 88
        %v615 = vpop.permute.xlu0 %614
        %616 = vrot.lane.b32.xlu0 %v466, 88
        %v617 = vpop.permute.xlu0 %616
        %v621 = vsel %vm527, %v613, 0
        %623 = vmatpush.msra.mxu0 0.0
        %624 = vmatpush.msra.mxu0 0.0
        %625 = vmatpush.msra.mxu0 0.0
        %626 = vmatpush.msra.mxu0 0.0
        %627 = vmatpush.msra.mxu0 0.0
        %628 = vmatpush.msra.mxu0 0.0
        %629 = vmatpush.msra.mxu0 0.0
        %630 = vmatpush.msra.mxu0 0.0
        %631 = vmatpush.msra.mxu0 0.0
        %632 = vmatpush.msra.mxu0 0.0
        %633 = vmatpush.msra.mxu0 0.0
        %634 = vmatpush.msra.mxu0 0.0
        %635 = vmatpush.msra.mxu0 0.0
        %636 = vmatpush.msra.mxu0 0.0
        %637 = vmatpush.msra.mxu0 %v617
        %638 = vmatpush.msra.mxu0 %v615
        %639 = vmatmul.f32.gmra.mxu0 %v621
        %v640 = vpop.f32.mrf.mxu0
        %v641 = vadd.f32 0.0, %v640
        %642 = vdwg.mxu0
        %v643 = vmul.f32 %v641, %v568
        %645 = vrot.lane.b32.xlu0 %v643, 8
        %v646 = vpop.permute.xlu0 %645
        %vm648 = vcmask 130112
        %649 = vst.msk [vmem:[#allocation2] sm:$0xff] %vm648, %v646
        %650 = vrot.lane.b32.xlu0 %v434, 112
        %v651 = vpop.permute.xlu0 %650
        %652 = vrot.lane.b32.xlu0 %v463, 112
        %v653 = vpop.permute.xlu0 %652
        %654 = vrot.lane.b32.xlu0 %v466, 112
        %v655 = vpop.permute.xlu0 %654
        %v656 = vsel %vm497, %v651, 0
        %v658 = vsel %vm497, %v653, 0
        %v660 = vsel %vm497, %v655, 0
        %662 = vmatpush.xpose.msra.mxu0 0.0
        %663 = vmatpush.xpose.msra.mxu0 0.0
        %664 = vmatpush.xpose.msra.mxu0 0.0
        %665 = vmatpush.xpose.msra.mxu0 0.0
        %666 = vmatpush.xpose.msra.mxu0 0.0
        %667 = vmatpush.xpose.msra.mxu0 0.0
        %668 = vmatpush.xpose.msra.mxu0 0.0
        %669 = vmatpush.xpose.msra.mxu0 0.0
        %670 = vmatpush.xpose.msra.mxu0 0.0
        %671 = vmatpush.xpose.msra.mxu0 0.0
        %672 = vmatpush.xpose.msra.mxu0 0.0
        %673 = vmatpush.xpose.msra.mxu0 0.0
        %674 = vmatpush.xpose.msra.mxu0 0.0
        %675 = vmatpush.xpose.msra.mxu0 0.0
        %676 = vmatpush.xpose.msra.mxu0 %v660
        %677 = vmatpush.xpose.msra.mxu0 %v658
        %678 = vmatmul.f32.gmra.mxu0 %v656
        %v679 = vpop.f32.mrf.mxu0
        %v680 = vadd.f32 %v496, %v679
        %681 = vdwg.mxu0
        %v682 = vsel %vm527, %v680, -inf
        %683 = vmax.xlane.f32.xlu0 %v682
        %v684 = vpop.xlane.xlu0 %683
        %v685 = vsub.f32 %v680, %v684
        %v686 = vmul.f32 %v685, 1.442695
        %v687 = vpow.pop %v686
        %v688 = vsel %vm527, %v687, 0.0
        %689 = vadd.xlane.f32.xlu0 %v688
        %v690 = vpop.xlane.xlu0 %689
        %v691 = vrcp.pop %v690
        %v692 = vmul.f32 %v687, %v691
        %693 = vrot.lane.b32.xlu0 %v463, 80
        %v694 = vpop.permute.xlu0 %693
        %695 = vrot.lane.b32.xlu0 %v466, 80
        %v696 = vpop.permute.xlu0 %695
        %v700 = vsel %vm527, %v692, 0
        %702 = vmatpush.msra.mxu0 0.0
        %703 = vmatpush.msra.mxu0 0.0
        %704 = vmatpush.msra.mxu0 0.0
        %705 = vmatpush.msra.mxu0 0.0
        %706 = vmatpush.msra.mxu0 0.0
        %707 = vmatpush.msra.mxu0 0.0
        %708 = vmatpush.msra.mxu0 0.0
        %709 = vmatpush.msra.mxu0 0.0
        %710 = vmatpush.msra.mxu0 0.0
        %711 = vmatpush.msra.mxu0 0.0
        %712 = vmatpush.msra.mxu0 0.0
        %713 = vmatpush.msra.mxu0 0.0
        %714 = vmatpush.msra.mxu0 0.0
        %715 = vmatpush.msra.mxu0 0.0
        %716 = vmatpush.msra.mxu0 %v696
        %717 = vmatpush.msra.mxu0 %v694
        %718 = vmatmul.f32.gmra.mxu0 %v700
        %v719 = vpop.f32.mrf.mxu0
        %v720 = vadd.f32 0.0, %v719
        %721 = vdwg.mxu0
        %v722 = vmul.f32 %v720, %v568
        %724 = vrot.lane.b32.xlu0 %v722, 16
        %v725 = vpop.permute.xlu0 %724
        %vm727 = vcmask 195712
        %728 = vst.msk [vmem:[#allocation2] sm:$0xff] %vm727, %v725
        %729 = vrot.lane.b32.xlu0 %v434, 104
        %v730 = vpop.permute.xlu0 %729
        %731 = vrot.lane.b32.xlu0 %v463, 104
        %v732 = vpop.permute.xlu0 %731
        %733 = vrot.lane.b32.xlu0 %v466, 104
        %v734 = vpop.permute.xlu0 %733
        %v735 = vsel %vm497, %v730, 0
        %v737 = vsel %vm497, %v732, 0
        %v739 = vsel %vm497, %v734, 0
        %741 = vmatpush.xpose.msra.mxu0 0.0
        %742 = vmatpush.xpose.msra.mxu0 0.0
        %743 = vmatpush.xpose.msra.mxu0 0.0
        %744 = vmatpush.xpose.msra.mxu0 0.0
        %745 = vmatpush.xpose.msra.mxu0 0.0
        %746 = vmatpush.xpose.msra.mxu0 0.0
        %747 = vmatpush.xpose.msra.mxu0 0.0
        %748 = vmatpush.xpose.msra.mxu0 0.0
        %749 = vmatpush.xpose.msra.mxu0 0.0
        %750 = vmatpush.xpose.msra.mxu0 0.0
        %751 = vmatpush.xpose.msra.mxu0 0.0
        %752 = vmatpush.xpose.msra.mxu0 0.0
        %753 = vmatpush.xpose.msra.mxu0 0.0
        %754 = vmatpush.xpose.msra.mxu0 0.0
        %755 = vmatpush.xpose.msra.mxu0 %v739
        %756 = vmatpush.xpose.msra.mxu0 %v737
        %757 = vmatmul.f32.gmra.mxu0 %v735
        %v758 = vpop.f32.mrf.mxu0
        %v759 = vadd.f32 %v496, %v758
        %760 = vdwg.mxu0
        %v761 = vsel %vm527, %v759, -inf
        %762 = vmax.xlane.f32.xlu0 %v761
        %v763 = vpop.xlane.xlu0 %762
        %v764 = vsub.f32 %v759, %v763
        %v765 = vmul.f32 %v764, 1.442695
        %v766 = vpow.pop %v765
        %v767 = vsel %vm527, %v766, 0.0
        %768 = vadd.xlane.f32.xlu0 %v767
        %v769 = vpop.xlane.xlu0 %768
        %v770 = vrcp.pop %v769
        %v771 = vmul.f32 %v766, %v770
        %772 = vrot.lane.b32.xlu0 %v463, 72
        %v773 = vpop.permute.xlu0 %772
        %774 = vrot.lane.b32.xlu0 %v466, 72
        %v775 = vpop.permute.xlu0 %774
        %v779 = vsel %vm527, %v771, 0
        %781 = vmatpush.msra.mxu0 0.0
        %782 = vmatpush.msra.mxu0 0.0
        %783 = vmatpush.msra.mxu0 0.0
        %784 = vmatpush.msra.mxu0 0.0
        %785 = vmatpush.msra.mxu0 0.0
        %786 = vmatpush.msra.mxu0 0.0
        %787 = vmatpush.msra.mxu0 0.0
        %788 = vmatpush.msra.mxu0 0.0
        %789 = vmatpush.msra.mxu0 0.0
        %790 = vmatpush.msra.mxu0 0.0
        %791 = vmatpush.msra.mxu0 0.0
        %792 = vmatpush.msra.mxu0 0.0
        %793 = vmatpush.msra.mxu0 0.0
        %794 = vmatpush.msra.mxu0 0.0
        %795 = vmatpush.msra.mxu0 %v775
        %796 = vmatpush.msra.mxu0 %v773
        %797 = vmatmul.f32.gmra.mxu0 %v779
        %v798 = vpop.f32.mrf.mxu0
        %v799 = vadd.f32 0.0, %v798
        %800 = vdwg.mxu0
        %v801 = vmul.f32 %v799, %v568
        %803 = vrot.lane.b32.xlu0 %v801, 24
        %v804 = vpop.permute.xlu0 %803
        %vm806 = vcmask 261312
        %807 = vst.msk [vmem:[#allocation2] sm:$0xff] %vm806, %v804
        %v808 = vld [vmem:[#allocation2] sm:$0xff]
        %v809 = vld [vmem:[#allocation12] sm:$0xff]
        %v810 = vld [vmem:[#allocation12 + $0x8] sm:$0xff]
        %v811 = vld [vmem:[#allocation12 + $0x10] sm:$0xff]
        %v812 = vld [vmem:[#allocation12 + $0x18] sm:$0xff]
        %v813 = vld [vmem:[%s6] sm:$0x1]
        %v815 = vperm.slane %v813, 0
        %v818 = vsel %vm410, %v808, 0
        %820 = vmatpush.msra.mxu0 0.0
        %821 = vmatpush.msra.mxu0 0.0
        %822 = vmatpush.msra.mxu0 0.0
        %823 = vmatpush.msra.mxu0 0.0
        %824 = vmatpush.msra.mxu0 0.0
        %825 = vmatpush.msra.mxu0 0.0
        %826 = vmatpush.msra.mxu0 0.0
        %827 = vmatpush.msra.mxu0 0.0
        %828 = vmatpush.msra.mxu0 0.0
        %829 = vmatpush.msra.mxu0 0.0
        %830 = vmatpush.msra.mxu0 0.0
        %831 = vmatpush.msra.mxu0 0.0
        %832 = vmatpush.msra.mxu0 %v812
        %833 = vmatpush.msra.mxu0 %v811
        %834 = vmatpush.msra.mxu0 %v810
        %835 = vmatpush.msra.mxu0 %v809
        %836 = vmatmul.f32.gmra.mxu0 %v818
        %v837 = vpop.f32.mrf.mxu0
        %v838 = vadd.f32 %v815, %v837
        %839 = vdwg.mxu0
        %840 = vst.msk [vmem:[%s401] sm:$0xff] %vm410, %v838
        %s841 = sand.u32 %s194, 1
        %s842 = scalar_lea.sflag [#allocation5], %s841
        %s843 = sand.u32 %s194, 1
        %s844 = smul.addr %s843, 8
        %s845 = scalar_lea.vmem [#allocation14], %s844
        // Predicated region
        $region73: #{tpu_custom_call.1} parent=47 // pred_check
          %p846 = pneg %p204
        $region74: #{tpu_custom_call.1} parent=47 // pred_check_branch
          %848 = sbr.rel (%p846) target = $region76
        $region75: #{tpu_custom_call.1} parent=47 // pred_region
          %850 = vsyncadd %s842, 0
          %s851 = smul.addr %s29, 8
          %s852 = scalar_lea.hbm %s7, %s851
          %s854 = sshll.u32 %s845, 4
          %s855 = int_to_ptr.vmem [resolvable:$true] %s854
          %s856 = sshll.u32 %s852, 4
          %s857 = int_to_ptr.hbm [resolvable:$true] %s856
          %859 = dma.vmem_to_hbm [thread:$0]  %s855, 128, %s857, %s842
        $region76: #{tpu_custom_call.1} parent=47 // pred_fallthru
          _
      $region48: #{tpu_custom_call.1} parent=5 // pred_fallthru
        _
      %p860 = scmp.le.s32.totalorder 2, %s24
      // Predicated region
      $region77: #{tpu_custom_call.1} parent=5 // pred_check
        %p861 = pneg %p860
      $region78: #{tpu_custom_call.1} parent=5 // pred_check_branch
        %863 = sbr.rel (%p861) target = $region80
      $region79: #{tpu_custom_call.1} parent=5 // pred_region
        %s864 = ssub.s32 %s24, 2
        // Predicated region
        $region81: #{tpu_custom_call.1} parent=79 // pred_check
          %p865 = pneg %p210
        $region82: #{tpu_custom_call.1} parent=79 // pred_check_branch
          %867 = sbr.rel (%p865) target = $region84
        $region83: #{tpu_custom_call.1} parent=79 // pred_region
          %s868 = sand.u32 %s195, 1
          %s869 = scalar_lea.sflag [#allocation5], %s868
          %s870 = sand.u32 %s195, 1
          %s871 = smul.addr %s870, 8
          %s872 = scalar_lea.vmem [#allocation14], %s871
          %874 = dma.done %s869, 128
        $region84: #{tpu_custom_call.1} parent=79 // pred_fallthru
          _
      $region80: #{tpu_custom_call.1} parent=5 // pred_fallthru
        _
    $region6: #{tpu_custom_call.1} parent=1 // loop_footer
      %s28 = sadd.s32 1, %s24
    $region7: #{tpu_custom_call.1} parent=1 // loop_footer_branch
      %23 = sbr.rel target = $region3
    $region8: #{tpu_custom_call.1} parent=1 // loop_exit
      _
    %875 = vsyncpa [#allocation4], 1
    %s876 = scalar_lea.sflag [#allocation4], 1
    %877 = vsyncpa %s876, 1
    %878 = vsyncpa [#allocation7], 1
    %s879 = scalar_lea.sflag [#allocation7], 1
    %880 = vsyncpa %s879, 1
    %881 = vsyncpa [#allocation10], 1
    %882 = vsyncpa [#allocation13], 1
    %883 = vsyncpa [#allocation5], 1
    %s884 = scalar_lea.sflag [#allocation5], 1
    %885 = vsyncpa %s884, 1

</llo_original>
